<compile_context>
chip_gen: v7x
topology: tpu7x:2x2x1
jax: 0.10.0
libtpu: 0.0.40
codegen_flags: <defaults>
</compile_context>

<pallas_src>
import functools

import jax
import jax.numpy as jnp
from jax.experimental import pallas as pl
from jax.experimental.pallas import tpu as pltpu

_LANE = 128    # TPU lane width (last dim of a vreg)
_SUBLANE = 8   # f32 sublane count


def _any_nonzero_kernel(col_ref, y_ref):
    """col_ref: (tile_rows, 128) lane-dense block of the decision column
    (zero-padded). y_ref: (1,) int32 scalar in SMEM, OR-accumulated across
    the sequential grid."""
    @pl.when(pl.program_id(0) == 0)
    def _init():
        y_ref[0] = jnp.int32(0)

    # Whole-vreg compare on the VPU, then reduce to a scalar.  Zero padding
    # added by the wrapper cannot flip the result.
    blk_any = jnp.max((col_ref[...] != 0).astype(jnp.int32))
    y_ref[0] = jnp.maximum(y_ref[0], blk_any)


@functools.partial(jax.jit, static_argnames=("max_tile_rows",))
def get_action(obs: jax.Array, *, max_tile_rows: int = 1024) -> jax.Array:
    """Pallas equivalent of Agent_1.get_action.

    obs: [N, D] array (stack of observation vectors, any numeric dtype).
    returns: int32 array of shape (1,) — 1 if any obs[i, 1] != 0, else 0.
    """
    obs = jnp.asarray(obs)
    n = obs.shape[0]
    # Reference code indexes x[i][1], so D >= 2 is part of the spec; this
    # static slice raises at trace time if D < 2 (Pallas would not check).
    col = obs[:, 1]                                  # (N,), native dtype

    # Lay the column out lane-dense and pad with zeros up to a whole number
    # of (tile_rows, 128) blocks so every grid step sees a full block.
    rows = max(_SUBLANE, pl.cdiv(n, _LANE))
    rows = pl.cdiv(rows, _SUBLANE) * _SUBLANE
    tile_rows = min(rows, max_tile_rows)
    rows = pl.cdiv(rows, tile_rows) * tile_rows
    col2d = jnp.pad(col, (0, rows * _LANE - n)).reshape(rows, _LANE)

    # TODO(synk): for inputs that fit a single block, a plain jitted
    # jnp.any(obs[:, 1] != 0) is faster than any custom-call dispatch; the
    # Pallas path is kept as the requested kernel implementation.
    y = pl.pallas_call(
        _any_nonzero_kernel,
        out_shape=jax.ShapeDtypeStruct((1,), jnp.int32),
        grid=(rows // tile_rows,),
        in_specs=[pl.BlockSpec((tile_rows, _LANE), lambda i: (i, 0))],
        out_specs=pl.BlockSpec(memory_space=pltpu.MemorySpace.SMEM),
        compiler_params=pltpu.CompilerParams(
            dimension_semantics=("arbitrary",)),  # OR-accumulates into SMEM
    )(col2d)
    return y


def d_D(aaa) -> jax.Array:
    """Pallas-free glue, matches Agent_1.d_D: cast a list of scalars to a
    float row-vector of shape (1, len(aaa))."""
    return jnp.asarray([aaa], dtype=jnp.float32)


class Agent1:
    """Thin wrapper mirroring the nn.Module interface (no parameters)."""

    def forward(self):
        # Reference forward() is `pass`.
        return None

    def get_action(self, obs):
        return get_action(obs)

    def d_D(self, aaa):
        return d_D(aaa)


if __name__ == "__main__":
    key = jax.random.PRNGKey(0)

    N, D = 8, 4  # 8 observation vectors, 4 features each
    agent = Agent1()

    # Case 1: random obs — column 1 almost surely has a nonzero entry -> y = 1
    obs1 = jax.random.normal(key, (N, D), dtype=jnp.float32)
    y1 = jax.block_until_ready(agent.get_action(obs1))

    # Case 2: zero out column 1 entirely -> COOP stays 1 -> y = 0
    obs2 = obs1.at[:, 1].set(0.0)
    y2 = jax.block_until_ready(agent.get_action(obs2))

    # Case 3/4: bf16 input, larger N, forced small tile -> multi-block grid
    # exercises the SMEM OR-accumulation path. Native dtype, no cast.
    obs3 = jax.random.normal(jax.random.PRNGKey(1), (3000, D), dtype=jnp.bfloat16)
    obs3 = obs3.at[:, 1].set(0)                      # expect 0
    y3 = jax.block_until_ready(get_action(obs3, max_tile_rows=8))
    obs4 = obs3.at[2999, 1].set(1.0)                 # one nonzero -> expect 1
    y4 = jax.block_until_ready(get_action(obs4, max_tile_rows=8))

    # Reference checks (pure JAX semantics of the PyTorch loop)
    ref1 = int(jnp.any(obs1[:, 1] != 0))
    ref2 = int(jnp.any(obs2[:, 1] != 0))
    ref3 = int(jnp.any(obs3[:, 1] != 0))
    ref4 = int(jnp.any(obs4[:, 1] != 0))

    for y, ref in ((y1, ref1), (y2, ref2), (y3, ref3), (y4, ref4)):
        assert y.shape == (1,) and y.dtype == jnp.int32, (y.shape, y.dtype)
        assert int(y[0]) == ref, (y, ref)

    # d_D glue check
    row = agent.d_D([1, 2, 3])
    assert row.shape == (1, 3) and row.dtype == jnp.float32

    print("KERNEL_OK")
</pallas_src>

<mosaic_0001>
module attributes {stable_mosaic.version = 11 : i64} {
  func.func @_any_nonzero_kernel(%arg0: i32, %arg1: memref<8x128xf32, #tpu.memory_space<vmem>>, %arg2: memref<1xi32, #tpu.memory_space<smem>>) attributes {dimension_semantics = [#tpu.dimension_semantics<arbitrary>], iteration_bounds = array<i64: 1>, scalar_prefetch = 0 : i64, scratch_operands = 0 : i64, tpu.core_type = #tpu.core_type<tc>, window_params = [{transform_indices = @transform_0, window_bounds = array<i64: 8, 128>}, {transform_indices = @transform_1, window_bounds = array<i64: 1>}]} {
    %c0_i32 = arith.constant 0 : i32
    %0 = arith.cmpi eq, %arg0, %c0_i32 : i32
    %1 = arith.extui %0 : i1 to i32
    %c0_i32_0 = arith.constant 0 : i32
    %2 = arith.cmpi ne, %1, %c0_i32_0 : i32
    scf.if %2 {
      %c0_i32_5 = arith.constant 0 : i32
      %c0_6 = arith.constant 0 : index
      %14 = memref.load %arg2[%c0_6] : memref<1xi32, #tpu.memory_space<smem>>
      memref.store %c0_i32_5, %arg2[%c0_6] : memref<1xi32, #tpu.memory_space<smem>>
    } else {
    }
    %c0 = arith.constant 0 : index
    %c0_1 = arith.constant 0 : index
    %3 = vector.load %arg1[%c0, %c0_1] : memref<8x128xf32, #tpu.memory_space<vmem>>, vector<8x128xf32>
    %cst = arith.constant 0.000000e+00 : f32
    %4 = vector.broadcast %cst : f32 to vector<8x128xf32>
    %5 = arith.cmpf one, %3, %4 : vector<8x128xf32>
    %6 = arith.extui %5 : vector<8x128xi1> to vector<8x128xi32>
    %7 = vector.shape_cast %6 : vector<8x128xi32> to vector<1x8x128xi32>
    %cst_2 = arith.constant dense<-2147483648> : vector<1xi32>
    %8 = vector.multi_reduction <maxsi>, %7, %cst_2 [1, 2] : vector<1x8x128xi32> to vector<1xi32>
    %9 = vector.shape_cast %8 : vector<1xi32> to vector<1x1x1xi32>
    %10 = vector.extract %9[0, 0, 0] : i32 from vector<1x1x1xi32>
    %c0_3 = arith.constant 0 : index
    %11 = memref.load %arg2[%c0_3] : memref<1xi32, #tpu.memory_space<smem>>
    %12 = arith.maxsi %11, %10 : i32
    %c0_4 = arith.constant 0 : index
    %13 = memref.load %arg2[%c0_4] : memref<1xi32, #tpu.memory_space<smem>>
    memref.store %12, %arg2[%c0_4] : memref<1xi32, #tpu.memory_space<smem>>
    return
  }
  func.func @transform_0(%arg0: i32) -> (i32, i32) {
    %c0_i32 = arith.constant 0 : i32
    %c0_i32_0 = arith.constant 0 : i32
    return %arg0, %c0_i32 : i32, i32
  }
  func.func @transform_1(%arg0: i32) -> i32 {
    %c0_i32 = arith.constant 0 : i32
    %c0_i32_0 = arith.constant 0 : i32
    return %c0_i32 : i32
  }
}

</mosaic_0001>

<llo_original>
// kernel: get_action.1
$region0: #{get_action.1}
  #allocation0 [shape = 'u32[]', space=smem, size = 0x4, offset = 0x4, fixed_abs, tag = 'smem constant byte address 0x4 - core index']
  #allocation1 [shape = 'u32[144,128]{1,0:T(1,128)}', space=vmem, size = 0x12000, scoped, tag = 'internal scratch']
  %s0 = inlined_call_operand.vmem [shape: f32[8,128], index: 0, kind: input, shape index: {}]
  %s1 = inlined_call_operand.hbm [shape: s32[1], index: 1, kind: output, shape index: {}]
  %s2 = sld [smem:[#allocation0]]
  $region18: #{get_action.1} parent=0
    _
  %s4 = ssub.s32 1, %s2
  %s5 = scalar_select 0, %s4, %s2
  $region1: #{get_action.1} parent=0
    #allocation2 [shape = 'u8[512]{0}', space=smem, size = 0x200, scoped, tag = 'output window, operand 0, single buffered']
    #allocation3 [shape = 's32[1]{0}', space=sflag, size = 0x4, scoped, tag = 'scoped memory for get_action.1']
    %6 = vsyncpa [#allocation3], 0
    // Predicated region
    $region2: #{get_action.1} parent=1 // pred_check
      _
    $region3: #{get_action.1} parent=1 // pred_check_branch
      %8 = sbr.rel (0) target = $region5
    $region4: #{get_action.1} parent=1 // pred_region
      _
    $region5: #{get_action.1} parent=1 // pred_fallthru
      _
    %p9 = scmp.eq.s32.totalorder 0, 0
    // Predicated region
    $region6: #{get_action.1} parent=1 // pred_check
      %p10 = pneg %p9
    $region7: #{get_action.1} parent=1 // pred_check_branch
      %12 = sbr.rel (%p10) target = $region9
    $region8: #{get_action.1} parent=1 // pred_region
      %s13 = scalar_lea.smem [#allocation2], 0
      %14 = sst [smem:[%s13]] 0
    $region9: #{get_action.1} parent=1 // pred_fallthru
      _
    %v15 = vld [vmem:[%s0] sm:$0xff]
    %vm16 = vcmp.ne.f32.partialorder %v15, 0.0
    %v17 = vsel %vm16, 1, 0
    %v18 = vand.u32 %v17, 65535
    %v19 = vshra.s32 %v17, 16
    %v20 = vcvt.s32.f32 %v18
    %v21 = vcvt.s32.f32 %v19
    %22 = vmax.xlane.f32.xlu0 %v21
    %v23 = vpop.xlane.xlu0 %22
    %vm24 = vcmp.eq.f32.partialorder %v21, %v23
    %v25 = vsel %vm24, %v20, -inf
    %26 = vmax.xlane.f32.xlu0 %v25
    %v27 = vpop.xlane.xlu0 %26
    %v28 = vcvt.f32.s32 %v27
    %v29 = vcvt.f32.s32 %v23
    %v30 = vshll.u32 %v29, 16
    %v31 = vadd.s32 %v30, %v28
    %v32 = vrot.slane %v31, 4
    %vm33 = vcmp.gt.s32.totalorder %v31, %v32
    %v34 = vsel %vm33, %v31, %v32
    %v35 = vrot.slane %v34, 2
    %vm36 = vcmp.gt.s32.totalorder %v34, %v35
    %v37 = vsel %vm36, %v34, %v35
    %v38 = vrot.slane %v37, 1
    %vm39 = vcmp.gt.s32.totalorder %v37, %v38
    %v40 = vsel %vm39, %v37, %v38
    %s41 = vtos %v40
    %s42 = sld [smem:[#allocation2]]
    %p43 = scmp.gt.s32.totalorder %s42, %s41
    %s44 = scalar_select %p43, %s42, %s41
    %s45 = scalar_lea.smem [#allocation2], 0
    %46 = sst [smem:[%s45]] %s44
    // Predicated region
    $region10: #{get_action.1} parent=1 // pred_check
      _
    $region11: #{get_action.1} parent=1 // pred_check_branch
      %48 = sbr.rel (0) target = $region13
    $region12: #{get_action.1} parent=1 // pred_region
      %s50 = ssub.s32 16, 16
      %51 = vsyncadd [#allocation3], %s50
      %54 = dma.smem_to_hbm [#allocation2], 16, %s1, [#allocation3]
    $region13: #{get_action.1} parent=1 // pred_fallthru
      _
    // Predicated region
    $region14: #{get_action.1} parent=1 // pred_check
      _
    $region15: #{get_action.1} parent=1 // pred_check_branch
      %56 = sbr.rel (0) target = $region17
    $region16: #{get_action.1} parent=1 // pred_region
      %57 = dma.done [#allocation3], 16
    $region17: #{get_action.1} parent=1 // pred_fallthru
      _
    %58 = sfence
    %59 = vsyncpa [#allocation3], 1

</llo_original>
